<compile_context>
chip_gen: v5e
topology: v5e:2x2
jax: 0.10.0
libtpu: 0.0.40
codegen_flags: <defaults>
</compile_context>

<pallas_src>
import jax
import jax.numpy as jnp
from jax.experimental import pallas as pl
from jax.experimental.pallas import tpu as pltpu

_LANE = 128
_MAX_TS = 512  # max sublanes per tile


def _edge_loss_kernel(out_ref, gt_ref, sum_ref, acc_ref):
    # out_ref / gt_ref: (9, TS, 128) gathered coordinate planes,
    # plane index = vertex_in_face * 3 + coord(x,y,z).
    i = pl.program_id(0)

    @pl.when(i == 0)
    def _init():
        acc_ref[...] = jnp.zeros_like(acc_ref)

    o = out_ref[...].astype(jnp.float32)
    g = gt_ref[...].astype(jnp.float32)

    def edge_len(p, a, b):
        dx = p[3 * a + 0] - p[3 * b + 0]
        dy = p[3 * a + 1] - p[3 * b + 1]
        dz = p[3 * a + 2] - p[3 * b + 2]
        return jnp.sqrt(dx * dx + dy * dy + dz * dz)

    diff = (jnp.abs(edge_len(o, 0, 1) - edge_len(g, 0, 1))
            + jnp.abs(edge_len(o, 0, 2) - edge_len(g, 0, 2))
            + jnp.abs(edge_len(o, 1, 2) - edge_len(g, 1, 2)))
    acc_ref[...] += diff                     # elementwise accumulate (VPU)

    @pl.when(i == pl.num_programs(0) - 1)
    def _finalize():
        sum_ref[0, 0] = jnp.sum(acc_ref[...])   # single XLU reduce


def _to_planes(coord, face, n_padded):
    """(B, V, 3) coords + (F, 3) faces -> (9, S, 128) lane-dense planes."""
    b = coord.shape[0]
    f = face.shape[0]
    g = coord[:, face, :]                                 # (B, F, 3verts, 3coords)
    g = jnp.transpose(g, (2, 3, 0, 1)).reshape(9, b * f)  # (vert*3+coord, B*F)
    g = jnp.pad(g, ((0, 0), (0, n_padded - b * f)))
    return g.reshape(9, n_padded // _LANE, _LANE)


def edge_length_loss(coord_out, coord_gt, face):
    """coord_out, coord_gt: (B, V, 3); face: (F, 3) int32. Returns scalar f32."""
    assert coord_out.shape == coord_gt.shape and coord_out.shape[-1] == 3
    b = coord_out.shape[0]
    f = face.shape[0]
    n = b * f

    sub = pl.cdiv(n, _LANE)                       # sublanes of real data
    if sub >= _MAX_TS:
        ts = _MAX_TS
    else:
        ts = max(8, ((sub + 7) // 8) * 8)         # single-step grid for small meshes
    s = ((sub + ts - 1) // ts) * ts               # padded sublane count
    n_padded = s * _LANE

    out_planes = _to_planes(coord_out, face, n_padded)
    gt_planes = _to_planes(coord_gt, face, n_padded)

    block = pl.BlockSpec((9, ts, _LANE), lambda i: (0, i, 0))

    itemsize = jnp.dtype(coord_out.dtype).itemsize
    cost = pl.CostEstimate(
        flops=60 * n_padded,                       # ~per-element VPU ops
        transcendentals=6 * n_padded,              # 6 sqrts per face slot
        bytes_accessed=2 * 9 * n_padded * itemsize + 4,
    )

    total = pl.pallas_call(
        _edge_loss_kernel,
        out_shape=jax.ShapeDtypeStruct((1, 1), jnp.float32),
        grid_spec=pltpu.PrefetchScalarGridSpec(
            num_scalar_prefetch=0,
            grid=(s // ts,),
            in_specs=[block, block],
            out_specs=pl.BlockSpec(memory_space=pltpu.MemorySpace.SMEM),
            scratch_shapes=[pltpu.VMEM((ts, _LANE), jnp.float32)],
        ),
        compiler_params=pltpu.CompilerParams(
            dimension_semantics=("arbitrary",)),
        cost_estimate=cost,
    )(out_planes, gt_planes)

    # torch: loss.mean() over the (B, 3*F, 1) tensor of edge-length diffs.
    return total[0, 0] / jnp.float32(b * 3 * f)


if __name__ == "__main__":
    key = jax.random.PRNGKey(0)
    k1, k2, k3 = jax.random.split(key, 3)

    B, V, F = 2, 32, 48  # small mesh: 2 samples, 32 vertices, 48 triangles
    coord_out = jax.random.normal(k1, (B, V, 3), dtype=jnp.float32)
    coord_gt = coord_out + 0.1 * jax.random.normal(k2, (B, V, 3), dtype=jnp.float32)
    face = jax.random.randint(k3, (F, 3), 0, V, dtype=jnp.int32)

    loss = edge_length_loss(coord_out, coord_gt, face)
    jax.block_until_ready(loss)

    # plain-JAX reference mirroring the PyTorch module
    def elen(c, a, bi):
        return jnp.sqrt(
            jnp.sum((c[:, face[:, a], :] - c[:, face[:, bi], :]) ** 2, axis=2))

    diffs = jnp.concatenate([
        jnp.abs(elen(coord_out, 0, 1) - elen(coord_gt, 0, 1)),
        jnp.abs(elen(coord_out, 0, 2) - elen(coord_gt, 0, 2)),
        jnp.abs(elen(coord_out, 1, 2) - elen(coord_gt, 1, 2)),
    ], axis=1)
    ref = jnp.mean(diffs)

    assert jnp.allclose(loss, ref, rtol=1e-5, atol=1e-6), (loss, ref)
    print("KERNEL_OK")
</pallas_src>

<mosaic_0001>
module attributes {stable_mosaic.version = 11 : i64} {
  func.func @_edge_loss_kernel(%arg0: i32, %arg1: memref<9x8x128xf32, #tpu.memory_space<vmem>>, %arg2: memref<9x8x128xf32, #tpu.memory_space<vmem>>, %arg3: memref<1x1xf32, #tpu.memory_space<smem>>, %arg4: memref<8x128xf32, #tpu.memory_space<vmem>>) attributes {dimension_semantics = [#tpu.dimension_semantics<arbitrary>], iteration_bounds = array<i64: 1>, scalar_prefetch = 0 : i64, scratch_operands = 1 : i64, tpu.core_type = #tpu.core_type<tc>, window_params = [{transform_indices = @transform_0, window_bounds = array<i64: 9, 8, 128>}, {transform_indices = @transform_1, window_bounds = array<i64: 9, 8, 128>}, {transform_indices = @transform_2, window_bounds = array<i64: 1, 1>}]} {
    %c0_i32 = arith.constant 0 : i32
    %0 = arith.cmpi eq, %arg0, %c0_i32 : i32
    %1 = arith.extui %0 : i1 to i32
    %c0_i32_0 = arith.constant 0 : i32
    %2 = arith.cmpi ne, %1, %c0_i32_0 : i32
    scf.if %2 {
      %cst = arith.constant 0.000000e+00 : f32
      %145 = vector.broadcast %cst : f32 to vector<8x128xf32>
      %c0_12 = arith.constant 0 : index
      %c0_13 = arith.constant 0 : index
      %146 = vector.load %arg4[%c0_12, %c0_13] : memref<8x128xf32, #tpu.memory_space<vmem>>, vector<8x128xf32>
      tpu.vector_store %arg4[%c0_12, %c0_13], %145 {strides = array<i32>} : memref<8x128xf32, #tpu.memory_space<vmem>>, vector<8x128xf32>,
    } else {
    }
    %c0 = arith.constant 0 : index
    %c0_1 = arith.constant 0 : index
    %c0_2 = arith.constant 0 : index
    %3 = vector.load %arg1[%c0, %c0_1, %c0_2] : memref<9x8x128xf32, #tpu.memory_space<vmem>>, vector<9x8x128xf32>
    %c0_3 = arith.constant 0 : index
    %c0_4 = arith.constant 0 : index
    %c0_5 = arith.constant 0 : index
    %4 = vector.load %arg2[%c0_3, %c0_4, %c0_5] : memref<9x8x128xf32, #tpu.memory_space<vmem>>, vector<9x8x128xf32>
    %5 = vector.extract_strided_slice %3 {offsets = [0, 0, 0], sizes = [1, 8, 128], strides = [1, 1, 1]} : vector<9x8x128xf32> to vector<1x8x128xf32>
    %6 = vector.shape_cast %5 : vector<1x8x128xf32> to vector<8x128xf32>
    %7 = vector.extract_strided_slice %3 {offsets = [3, 0, 0], sizes = [1, 8, 128], strides = [1, 1, 1]} : vector<9x8x128xf32> to vector<1x8x128xf32>
    %8 = vector.shape_cast %7 : vector<1x8x128xf32> to vector<8x128xf32>
    %9 = arith.subf %6, %8 : vector<8x128xf32>
    %10 = vector.extract_strided_slice %3 {offsets = [1, 0, 0], sizes = [1, 8, 128], strides = [1, 1, 1]} : vector<9x8x128xf32> to vector<1x8x128xf32>
    %11 = vector.shape_cast %10 : vector<1x8x128xf32> to vector<8x128xf32>
    %12 = vector.extract_strided_slice %3 {offsets = [4, 0, 0], sizes = [1, 8, 128], strides = [1, 1, 1]} : vector<9x8x128xf32> to vector<1x8x128xf32>
    %13 = vector.shape_cast %12 : vector<1x8x128xf32> to vector<8x128xf32>
    %14 = arith.subf %11, %13 : vector<8x128xf32>
    %15 = vector.extract_strided_slice %3 {offsets = [2, 0, 0], sizes = [1, 8, 128], strides = [1, 1, 1]} : vector<9x8x128xf32> to vector<1x8x128xf32>
    %16 = vector.shape_cast %15 : vector<1x8x128xf32> to vector<8x128xf32>
    %17 = vector.extract_strided_slice %3 {offsets = [5, 0, 0], sizes = [1, 8, 128], strides = [1, 1, 1]} : vector<9x8x128xf32> to vector<1x8x128xf32>
    %18 = vector.shape_cast %17 : vector<1x8x128xf32> to vector<8x128xf32>
    %19 = arith.subf %16, %18 : vector<8x128xf32>
    %20 = arith.mulf %9, %9 : vector<8x128xf32>
    %21 = arith.mulf %14, %14 : vector<8x128xf32>
    %22 = arith.addf %20, %21 : vector<8x128xf32>
    %23 = arith.mulf %19, %19 : vector<8x128xf32>
    %24 = arith.addf %22, %23 : vector<8x128xf32>
    %25 = math.sqrt %24 : vector<8x128xf32>
    %26 = vector.extract_strided_slice %4 {offsets = [0, 0, 0], sizes = [1, 8, 128], strides = [1, 1, 1]} : vector<9x8x128xf32> to vector<1x8x128xf32>
    %27 = vector.shape_cast %26 : vector<1x8x128xf32> to vector<8x128xf32>
    %28 = vector.extract_strided_slice %4 {offsets = [3, 0, 0], sizes = [1, 8, 128], strides = [1, 1, 1]} : vector<9x8x128xf32> to vector<1x8x128xf32>
    %29 = vector.shape_cast %28 : vector<1x8x128xf32> to vector<8x128xf32>
    %30 = arith.subf %27, %29 : vector<8x128xf32>
    %31 = vector.extract_strided_slice %4 {offsets = [1, 0, 0], sizes = [1, 8, 128], strides = [1, 1, 1]} : vector<9x8x128xf32> to vector<1x8x128xf32>
    %32 = vector.shape_cast %31 : vector<1x8x128xf32> to vector<8x128xf32>
    %33 = vector.extract_strided_slice %4 {offsets = [4, 0, 0], sizes = [1, 8, 128], strides = [1, 1, 1]} : vector<9x8x128xf32> to vector<1x8x128xf32>
    %34 = vector.shape_cast %33 : vector<1x8x128xf32> to vector<8x128xf32>
    %35 = arith.subf %32, %34 : vector<8x128xf32>
    %36 = vector.extract_strided_slice %4 {offsets = [2, 0, 0], sizes = [1, 8, 128], strides = [1, 1, 1]} : vector<9x8x128xf32> to vector<1x8x128xf32>
    %37 = vector.shape_cast %36 : vector<1x8x128xf32> to vector<8x128xf32>
    %38 = vector.extract_strided_slice %4 {offsets = [5, 0, 0], sizes = [1, 8, 128], strides = [1, 1, 1]} : vector<9x8x128xf32> to vector<1x8x128xf32>
    %39 = vector.shape_cast %38 : vector<1x8x128xf32> to vector<8x128xf32>
    %40 = arith.subf %37, %39 : vector<8x128xf32>
    %41 = arith.mulf %30, %30 : vector<8x128xf32>
    %42 = arith.mulf %35, %35 : vector<8x128xf32>
    %43 = arith.addf %41, %42 : vector<8x128xf32>
    %44 = arith.mulf %40, %40 : vector<8x128xf32>
    %45 = arith.addf %43, %44 : vector<8x128xf32>
    %46 = math.sqrt %45 : vector<8x128xf32>
    %47 = arith.subf %25, %46 : vector<8x128xf32>
    %48 = math.absf %47 : vector<8x128xf32>
    %49 = vector.extract_strided_slice %3 {offsets = [0, 0, 0], sizes = [1, 8, 128], strides = [1, 1, 1]} : vector<9x8x128xf32> to vector<1x8x128xf32>
    %50 = vector.shape_cast %49 : vector<1x8x128xf32> to vector<8x128xf32>
    %51 = vector.extract_strided_slice %3 {offsets = [6, 0, 0], sizes = [1, 8, 128], strides = [1, 1, 1]} : vector<9x8x128xf32> to vector<1x8x128xf32>
    %52 = vector.shape_cast %51 : vector<1x8x128xf32> to vector<8x128xf32>
    %53 = arith.subf %50, %52 : vector<8x128xf32>
    %54 = vector.extract_strided_slice %3 {offsets = [1, 0, 0], sizes = [1, 8, 128], strides = [1, 1, 1]} : vector<9x8x128xf32> to vector<1x8x128xf32>
    %55 = vector.shape_cast %54 : vector<1x8x128xf32> to vector<8x128xf32>
    %56 = vector.extract_strided_slice %3 {offsets = [7, 0, 0], sizes = [1, 8, 128], strides = [1, 1, 1]} : vector<9x8x128xf32> to vector<1x8x128xf32>
    %57 = vector.shape_cast %56 : vector<1x8x128xf32> to vector<8x128xf32>
    %58 = arith.subf %55, %57 : vector<8x128xf32>
    %59 = vector.extract_strided_slice %3 {offsets = [2, 0, 0], sizes = [1, 8, 128], strides = [1, 1, 1]} : vector<9x8x128xf32> to vector<1x8x128xf32>
    %60 = vector.shape_cast %59 : vector<1x8x128xf32> to vector<8x128xf32>
    %61 = vector.extract_strided_slice %3 {offsets = [8, 0, 0], sizes = [1, 8, 128], strides = [1, 1, 1]} : vector<9x8x128xf32> to vector<1x8x128xf32>
    %62 = vector.shape_cast %61 : vector<1x8x128xf32> to vector<8x128xf32>
    %63 = arith.subf %60, %62 : vector<8x128xf32>
    %64 = arith.mulf %53, %53 : vector<8x128xf32>
    %65 = arith.mulf %58, %58 : vector<8x128xf32>
    %66 = arith.addf %64, %65 : vector<8x128xf32>
    %67 = arith.mulf %63, %63 : vector<8x128xf32>
    %68 = arith.addf %66, %67 : vector<8x128xf32>
    %69 = math.sqrt %68 : vector<8x128xf32>
    %70 = vector.extract_strided_slice %4 {offsets = [0, 0, 0], sizes = [1, 8, 128], strides = [1, 1, 1]} : vector<9x8x128xf32> to vector<1x8x128xf32>
    %71 = vector.shape_cast %70 : vector<1x8x128xf32> to vector<8x128xf32>
    %72 = vector.extract_strided_slice %4 {offsets = [6, 0, 0], sizes = [1, 8, 128], strides = [1, 1, 1]} : vector<9x8x128xf32> to vector<1x8x128xf32>
    %73 = vector.shape_cast %72 : vector<1x8x128xf32> to vector<8x128xf32>
    %74 = arith.subf %71, %73 : vector<8x128xf32>
    %75 = vector.extract_strided_slice %4 {offsets = [1, 0, 0], sizes = [1, 8, 128], strides = [1, 1, 1]} : vector<9x8x128xf32> to vector<1x8x128xf32>
    %76 = vector.shape_cast %75 : vector<1x8x128xf32> to vector<8x128xf32>
    %77 = vector.extract_strided_slice %4 {offsets = [7, 0, 0], sizes = [1, 8, 128], strides = [1, 1, 1]} : vector<9x8x128xf32> to vector<1x8x128xf32>
    %78 = vector.shape_cast %77 : vector<1x8x128xf32> to vector<8x128xf32>
    %79 = arith.subf %76, %78 : vector<8x128xf32>
    %80 = vector.extract_strided_slice %4 {offsets = [2, 0, 0], sizes = [1, 8, 128], strides = [1, 1, 1]} : vector<9x8x128xf32> to vector<1x8x128xf32>
    %81 = vector.shape_cast %80 : vector<1x8x128xf32> to vector<8x128xf32>
    %82 = vector.extract_strided_slice %4 {offsets = [8, 0, 0], sizes = [1, 8, 128], strides = [1, 1, 1]} : vector<9x8x128xf32> to vector<1x8x128xf32>
    %83 = vector.shape_cast %82 : vector<1x8x128xf32> to vector<8x128xf32>
    %84 = arith.subf %81, %83 : vector<8x128xf32>
    %85 = arith.mulf %74, %74 : vector<8x128xf32>
    %86 = arith.mulf %79, %79 : vector<8x128xf32>
    %87 = arith.addf %85, %86 : vector<8x128xf32>
    %88 = arith.mulf %84, %84 : vector<8x128xf32>
    %89 = arith.addf %87, %88 : vector<8x128xf32>
    %90 = math.sqrt %89 : vector<8x128xf32>
    %91 = arith.subf %69, %90 : vector<8x128xf32>
    %92 = math.absf %91 : vector<8x128xf32>
    %93 = arith.addf %48, %92 : vector<8x128xf32>
    %94 = vector.extract_strided_slice %3 {offsets = [3, 0, 0], sizes = [1, 8, 128], strides = [1, 1, 1]} : vector<9x8x128xf32> to vector<1x8x128xf32>
    %95 = vector.shape_cast %94 : vector<1x8x128xf32> to vector<8x128xf32>
    %96 = vector.extract_strided_slice %3 {offsets = [6, 0, 0], sizes = [1, 8, 128], strides = [1, 1, 1]} : vector<9x8x128xf32> to vector<1x8x128xf32>
    %97 = vector.shape_cast %96 : vector<1x8x128xf32> to vector<8x128xf32>
    %98 = arith.subf %95, %97 : vector<8x128xf32>
    %99 = vector.extract_strided_slice %3 {offsets = [4, 0, 0], sizes = [1, 8, 128], strides = [1, 1, 1]} : vector<9x8x128xf32> to vector<1x8x128xf32>
    %100 = vector.shape_cast %99 : vector<1x8x128xf32> to vector<8x128xf32>
    %101 = vector.extract_strided_slice %3 {offsets = [7, 0, 0], sizes = [1, 8, 128], strides = [1, 1, 1]} : vector<9x8x128xf32> to vector<1x8x128xf32>
    %102 = vector.shape_cast %101 : vector<1x8x128xf32> to vector<8x128xf32>
    %103 = arith.subf %100, %102 : vector<8x128xf32>
    %104 = vector.extract_strided_slice %3 {offsets = [5, 0, 0], sizes = [1, 8, 128], strides = [1, 1, 1]} : vector<9x8x128xf32> to vector<1x8x128xf32>
    %105 = vector.shape_cast %104 : vector<1x8x128xf32> to vector<8x128xf32>
    %106 = vector.extract_strided_slice %3 {offsets = [8, 0, 0], sizes = [1, 8, 128], strides = [1, 1, 1]} : vector<9x8x128xf32> to vector<1x8x128xf32>
    %107 = vector.shape_cast %106 : vector<1x8x128xf32> to vector<8x128xf32>
    %108 = arith.subf %105, %107 : vector<8x128xf32>
    %109 = arith.mulf %98, %98 : vector<8x128xf32>
    %110 = arith.mulf %103, %103 : vector<8x128xf32>
    %111 = arith.addf %109, %110 : vector<8x128xf32>
    %112 = arith.mulf %108, %108 : vector<8x128xf32>
    %113 = arith.addf %111, %112 : vector<8x128xf32>
    %114 = math.sqrt %113 : vector<8x128xf32>
    %115 = vector.extract_strided_slice %4 {offsets = [3, 0, 0], sizes = [1, 8, 128], strides = [1, 1, 1]} : vector<9x8x128xf32> to vector<1x8x128xf32>
    %116 = vector.shape_cast %115 : vector<1x8x128xf32> to vector<8x128xf32>
    %117 = vector.extract_strided_slice %4 {offsets = [6, 0, 0], sizes = [1, 8, 128], strides = [1, 1, 1]} : vector<9x8x128xf32> to vector<1x8x128xf32>
    %118 = vector.shape_cast %117 : vector<1x8x128xf32> to vector<8x128xf32>
    %119 = arith.subf %116, %118 : vector<8x128xf32>
    %120 = vector.extract_strided_slice %4 {offsets = [4, 0, 0], sizes = [1, 8, 128], strides = [1, 1, 1]} : vector<9x8x128xf32> to vector<1x8x128xf32>
    %121 = vector.shape_cast %120 : vector<1x8x128xf32> to vector<8x128xf32>
    %122 = vector.extract_strided_slice %4 {offsets = [7, 0, 0], sizes = [1, 8, 128], strides = [1, 1, 1]} : vector<9x8x128xf32> to vector<1x8x128xf32>
    %123 = vector.shape_cast %122 : vector<1x8x128xf32> to vector<8x128xf32>
    %124 = arith.subf %121, %123 : vector<8x128xf32>
    %125 = vector.extract_strided_slice %4 {offsets = [5, 0, 0], sizes = [1, 8, 128], strides = [1, 1, 1]} : vector<9x8x128xf32> to vector<1x8x128xf32>
    %126 = vector.shape_cast %125 : vector<1x8x128xf32> to vector<8x128xf32>
    %127 = vector.extract_strided_slice %4 {offsets = [8, 0, 0], sizes = [1, 8, 128], strides = [1, 1, 1]} : vector<9x8x128xf32> to vector<1x8x128xf32>
    %128 = vector.shape_cast %127 : vector<1x8x128xf32> to vector<8x128xf32>
    %129 = arith.subf %126, %128 : vector<8x128xf32>
    %130 = arith.mulf %119, %119 : vector<8x128xf32>
    %131 = arith.mulf %124, %124 : vector<8x128xf32>
    %132 = arith.addf %130, %131 : vector<8x128xf32>
    %133 = arith.mulf %129, %129 : vector<8x128xf32>
    %134 = arith.addf %132, %133 : vector<8x128xf32>
    %135 = math.sqrt %134 : vector<8x128xf32>
    %136 = arith.subf %114, %135 : vector<8x128xf32>
    %137 = math.absf %136 : vector<8x128xf32>
    %138 = arith.addf %93, %137 : vector<8x128xf32>
    %c0_6 = arith.constant 0 : index
    %c0_7 = arith.constant 0 : index
    %139 = vector.load %arg4[%c0_6, %c0_7] : memref<8x128xf32, #tpu.memory_space<vmem>>, vector<8x128xf32>
    %140 = arith.addf %139, %138 : vector<8x128xf32>
    %c0_8 = arith.constant 0 : index
    %c0_9 = arith.constant 0 : index
    %141 = vector.load %arg4[%c0_8, %c0_9] : memref<8x128xf32, #tpu.memory_space<vmem>>, vector<8x128xf32>
    tpu.vector_store %arg4[%c0_8, %c0_9], %140 {strides = array<i32>} : memref<8x128xf32, #tpu.memory_space<vmem>>, vector<8x128xf32>,
    %c0_i32_10 = arith.constant 0 : i32
    %142 = arith.cmpi eq, %arg0, %c0_i32_10 : i32
    %143 = arith.extui %142 : i1 to i32
    %c0_i32_11 = arith.constant 0 : i32
    %144 = arith.cmpi ne, %143, %c0_i32_11 : i32
    scf.if %144 {
      %c0_12 = arith.constant 0 : index
      %c0_13 = arith.constant 0 : index
      %145 = vector.load %arg4[%c0_12, %c0_13] : memref<8x128xf32, #tpu.memory_space<vmem>>, vector<8x128xf32>
      %146 = vector.shape_cast %145 : vector<8x128xf32> to vector<1x8x128xf32>
      %cst = arith.constant dense<0.000000e+00> : vector<1xf32>
      %147 = vector.multi_reduction <add>, %146, %cst [1, 2] : vector<1x8x128xf32> to vector<1xf32>
      %148 = vector.shape_cast %147 : vector<1xf32> to vector<1x1x1xf32>
      %149 = vector.extract %148[0, 0, 0] : f32 from vector<1x1x1xf32>
      %c0_14 = arith.constant 0 : index
      %c0_15 = arith.constant 0 : index
      %150 = memref.load %arg3[%c0_14, %c0_15] : memref<1x1xf32, #tpu.memory_space<smem>>
      memref.store %149, %arg3[%c0_14, %c0_15] : memref<1x1xf32, #tpu.memory_space<smem>>
    } else {
    }
    return
  }
  func.func @transform_0(%arg0: i32) -> (i32, i32, i32) {
    %c0_i32 = arith.constant 0 : i32
    %c0_i32_0 = arith.constant 0 : i32
    %c0_i32_1 = arith.constant 0 : i32
    return %c0_i32, %arg0, %c0_i32_0 : i32, i32, i32
  }
  func.func @transform_1(%arg0: i32) -> (i32, i32, i32) {
    %c0_i32 = arith.constant 0 : i32
    %c0_i32_0 = arith.constant 0 : i32
    %c0_i32_1 = arith.constant 0 : i32
    return %c0_i32, %arg0, %c0_i32_0 : i32, i32, i32
  }
  func.func @transform_2(%arg0: i32) -> (i32, i32) {
    %c0_i32 = arith.constant 0 : i32
    %c0_i32_0 = arith.constant 0 : i32
    %c0_i32_1 = arith.constant 0 : i32
    return %c0_i32, %c0_i32_0 : i32, i32
  }
}

</mosaic_0001>

<llo_original>
// kernel: tpu_custom_call.1
$region0: #{tpu_custom_call.1}
  #allocation0 [shape = 'u32[]', space=smem, size = 0x4, offset = 0x4, fixed_abs, tag = 'smem constant byte address 0x4 - core index']
  #allocation1 [shape = 'u32[72,128]{1,0:T(1,128)}', space=vmem, size = 0x9000, scoped, tag = 'internal scratch']
  #allocation2 [shape = 'f32[8,128]{1,0:T(8,128)}', space=vmem, size = 0x1000, scoped, tag = 'scratch operand']
  %s0 = inlined_call_operand.hbm [shape: f32[9,8,128], index: 0, kind: input, shape index: {}]
  %s1 = inlined_call_operand.hbm [shape: f32[9,8,128], index: 1, kind: input, shape index: {}]
  %s2 = inlined_call_operand.hbm [shape: f32[1,1], index: 2, kind: output, shape index: {}]
  %s3 = sld [smem:[#allocation0]]
  $region34: #{tpu_custom_call.1} parent=0
    _
  %s5 = ssub.s32 1, %s3
  %s6 = scalar_select 0, %s5, %s3
  $region1: #{tpu_custom_call.1} parent=0
    #allocation3 [shape = 'u8[36864]{0}', space=vmem, size = 0x9000, scoped, tag = 'input window, operand 0, single buffered']
    #allocation4 [shape = 's32[1]{0}', space=sflag, size = 0x4, scoped, tag = 'scoped memory for tpu_custom_call.1']
    #allocation5 [shape = 's32[1]{0}', space=sflag, size = 0x4, scoped, tag = 'scoped memory for tpu_custom_call.1']
    #allocation6 [shape = 'u8[36864]{0}', space=vmem, size = 0x9000, scoped, tag = 'input window, operand 1, single buffered']
    #allocation7 [shape = 's32[1]{0}', space=sflag, size = 0x4, scoped, tag = 'scoped memory for tpu_custom_call.1']
    #allocation8 [shape = 'u8[512]{0}', space=smem, size = 0x200, scoped, tag = 'output window, operand 0, single buffered']
    %7 = vsyncpa [#allocation4], 0
    %8 = vsyncpa [#allocation7], 0
    %9 = vsyncpa [#allocation5], 0
    // Predicated region
    $region2: #{tpu_custom_call.1} parent=1 // pred_check
      _
    $region3: #{tpu_custom_call.1} parent=1 // pred_check_branch
      %11 = sbr.rel (0) target = $region5
    $region4: #{tpu_custom_call.1} parent=1 // pred_region
      %13 = vsyncadd [#allocation4], 0
      %s14 = sshll.u32 %s0, 4
      %s15 = int_to_ptr.hbm [resolvable:$true] %s14
      %s16 = sshll.u32 [#allocation3], 4
      %s17 = int_to_ptr.vmem [resolvable:$true] %s16
      %22 = dma.hbm_to_vmem [thread:$0]  %s15, 1152, %s17, [#allocation4], 128, 128, 8
    $region5: #{tpu_custom_call.1} parent=1 // pred_fallthru
      _
    // Predicated region
    $region6: #{tpu_custom_call.1} parent=1 // pred_check
      _
    $region7: #{tpu_custom_call.1} parent=1 // pred_check_branch
      %24 = sbr.rel (0) target = $region9
    $region8: #{tpu_custom_call.1} parent=1 // pred_region
      %26 = vsyncadd [#allocation7], 0
      %s27 = sshll.u32 %s1, 4
      %s28 = int_to_ptr.hbm [resolvable:$true] %s27
      %s29 = sshll.u32 [#allocation6], 4
      %s30 = int_to_ptr.vmem [resolvable:$true] %s29
      %35 = dma.hbm_to_vmem [thread:$0]  %s28, 1152, %s30, [#allocation7], 128, 128, 8
    $region9: #{tpu_custom_call.1} parent=1 // pred_fallthru
      _
    // Predicated region
    $region10: #{tpu_custom_call.1} parent=1 // pred_check
      _
    $region11: #{tpu_custom_call.1} parent=1 // pred_check_branch
      %37 = sbr.rel (0) target = $region13
    $region12: #{tpu_custom_call.1} parent=1 // pred_region
      %39 = dma.done [#allocation4], 1152
    $region13: #{tpu_custom_call.1} parent=1 // pred_fallthru
      _
    // Predicated region
    $region14: #{tpu_custom_call.1} parent=1 // pred_check
      _
    $region15: #{tpu_custom_call.1} parent=1 // pred_check_branch
      %41 = sbr.rel (0) target = $region17
    $region16: #{tpu_custom_call.1} parent=1 // pred_region
      %43 = dma.done [#allocation7], 1152
    $region17: #{tpu_custom_call.1} parent=1 // pred_fallthru
      _
    %p44 = scmp.eq.s32.totalorder 0, 0
    // Predicated region
    $region18: #{tpu_custom_call.1} parent=1 // pred_check
      %p45 = pneg %p44
    $region19: #{tpu_custom_call.1} parent=1 // pred_check_branch
      %47 = sbr.rel (%p45) target = $region21
    $region20: #{tpu_custom_call.1} parent=1 // pred_region
      %48 = vst [vmem:[#allocation2] sm:$0xff] 0.0
    $region21: #{tpu_custom_call.1} parent=1 // pred_fallthru
      _
    %v49 = vld [vmem:[#allocation3] sm:$0xff]
    %v50 = vld [vmem:[#allocation3 + $0x8] sm:$0xff]
    %v51 = vld [vmem:[#allocation3 + $0x10] sm:$0xff]
    %v52 = vld [vmem:[#allocation3 + $0x18] sm:$0xff]
    %v53 = vld [vmem:[#allocation3 + $0x20] sm:$0xff]
    %v54 = vld [vmem:[#allocation3 + $0x28] sm:$0xff]
    %v55 = vld [vmem:[#allocation3 + $0x30] sm:$0xff]
    %v56 = vld [vmem:[#allocation3 + $0x38] sm:$0xff]
    %v57 = vld [vmem:[#allocation3 + $0x40] sm:$0xff]
    %v58 = vld [vmem:[#allocation6] sm:$0xff]
    %v59 = vld [vmem:[#allocation6 + $0x8] sm:$0xff]
    %v60 = vld [vmem:[#allocation6 + $0x10] sm:$0xff]
    %v61 = vld [vmem:[#allocation6 + $0x18] sm:$0xff]
    %v62 = vld [vmem:[#allocation6 + $0x20] sm:$0xff]
    %v63 = vld [vmem:[#allocation6 + $0x28] sm:$0xff]
    %v64 = vld [vmem:[#allocation6 + $0x30] sm:$0xff]
    %v65 = vld [vmem:[#allocation6 + $0x38] sm:$0xff]
    %v66 = vld [vmem:[#allocation6 + $0x40] sm:$0xff]
    %v67 = vsub.f32 %v49, %v52
    %v68 = vsub.f32 %v50, %v53
    %v69 = vsub.f32 %v51, %v54
    %v70 = vmul.f32 %v67, %v67
    %v71 = vmul.f32 %v68, %v68
    %v72 = vadd.f32 %v70, %v71
    %v73 = vmul.f32 %v69, %v69
    %v74 = vadd.f32 %v72, %v73
    %v75 = vrsqrt.pop %v74
    %v76 = vmul.f32 %v75, %v74
    %v77 = vmul.f32 %v76, %v75
    %v78 = vmul.f32 0.5, %v77
    %v79 = vsub.f32 1.5, %v78
    %v80 = vmul.f32 %v75, %v79
    %v81 = vmul.f32 %v74, %v80
    %vm82 = vcmp.eq.f32.partialorder %v74, inf
    %v83 = vsel %vm82, %v74, %v81
    %vm84 = vcmp.eq.f32.partialorder %v74, 0.0
    %v85 = vand.u32 %v74, 2147483648
    %v86 = vsel %vm84, %v85, %v83
    %v87 = vsub.f32 %v58, %v61
    %v88 = vsub.f32 %v59, %v62
    %v89 = vsub.f32 %v60, %v63
    %v90 = vmul.f32 %v87, %v87
    %v91 = vmul.f32 %v88, %v88
    %v92 = vadd.f32 %v90, %v91
    %v93 = vmul.f32 %v89, %v89
    %v94 = vadd.f32 %v92, %v93
    %v95 = vrsqrt.pop %v94
    %v96 = vmul.f32 %v95, %v94
    %v97 = vmul.f32 %v96, %v95
    %v98 = vmul.f32 0.5, %v97
    %v99 = vsub.f32 1.5, %v98
    %v100 = vmul.f32 %v95, %v99
    %v101 = vmul.f32 %v94, %v100
    %vm102 = vcmp.eq.f32.partialorder %v94, inf
    %v103 = vsel %vm102, %v94, %v101
    %vm104 = vcmp.eq.f32.partialorder %v94, 0.0
    %v105 = vand.u32 %v94, 2147483648
    %v106 = vsel %vm104, %v105, %v103
    %v107 = vsub.f32 %v86, %v106
    %v108 = vand.u32 2147483647, %v107
    %v109 = vsub.f32 %v49, %v55
    %v110 = vsub.f32 %v50, %v56
    %v111 = vsub.f32 %v51, %v57
    %v112 = vmul.f32 %v109, %v109
    %v113 = vmul.f32 %v110, %v110
    %v114 = vadd.f32 %v112, %v113
    %v115 = vmul.f32 %v111, %v111
    %v116 = vadd.f32 %v114, %v115
    %v117 = vrsqrt.pop %v116
    %v118 = vmul.f32 %v117, %v116
    %v119 = vmul.f32 %v118, %v117
    %v120 = vmul.f32 0.5, %v119
    %v121 = vsub.f32 1.5, %v120
    %v122 = vmul.f32 %v117, %v121
    %v123 = vmul.f32 %v116, %v122
    %vm124 = vcmp.eq.f32.partialorder %v116, inf
    %v125 = vsel %vm124, %v116, %v123
    %vm126 = vcmp.eq.f32.partialorder %v116, 0.0
    %v127 = vand.u32 %v116, 2147483648
    %v128 = vsel %vm126, %v127, %v125
    %v129 = vsub.f32 %v58, %v64
    %v130 = vsub.f32 %v59, %v65
    %v131 = vsub.f32 %v60, %v66
    %v132 = vmul.f32 %v129, %v129
    %v133 = vmul.f32 %v130, %v130
    %v134 = vadd.f32 %v132, %v133
    %v135 = vmul.f32 %v131, %v131
    %v136 = vadd.f32 %v134, %v135
    %v137 = vrsqrt.pop %v136
    %v138 = vmul.f32 %v137, %v136
    %v139 = vmul.f32 %v138, %v137
    %v140 = vmul.f32 0.5, %v139
    %v141 = vsub.f32 1.5, %v140
    %v142 = vmul.f32 %v137, %v141
    %v143 = vmul.f32 %v136, %v142
    %vm144 = vcmp.eq.f32.partialorder %v136, inf
    %v145 = vsel %vm144, %v136, %v143
    %vm146 = vcmp.eq.f32.partialorder %v136, 0.0
    %v147 = vand.u32 %v136, 2147483648
    %v148 = vsel %vm146, %v147, %v145
    %v149 = vsub.f32 %v128, %v148
    %v150 = vand.u32 2147483647, %v149
    %v151 = vadd.f32 %v108, %v150
    %v152 = vsub.f32 %v52, %v55
    %v153 = vsub.f32 %v53, %v56
    %v154 = vsub.f32 %v54, %v57
    %v155 = vmul.f32 %v152, %v152
    %v156 = vmul.f32 %v153, %v153
    %v157 = vadd.f32 %v155, %v156
    %v158 = vmul.f32 %v154, %v154
    %v159 = vadd.f32 %v157, %v158
    %v160 = vrsqrt.pop %v159
    %v161 = vmul.f32 %v160, %v159
    %v162 = vmul.f32 %v161, %v160
    %v163 = vmul.f32 0.5, %v162
    %v164 = vsub.f32 1.5, %v163
    %v165 = vmul.f32 %v160, %v164
    %v166 = vmul.f32 %v159, %v165
    %vm167 = vcmp.eq.f32.partialorder %v159, inf
    %v168 = vsel %vm167, %v159, %v166
    %vm169 = vcmp.eq.f32.partialorder %v159, 0.0
    %v170 = vand.u32 %v159, 2147483648
    %v171 = vsel %vm169, %v170, %v168
    %v172 = vsub.f32 %v61, %v64
    %v173 = vsub.f32 %v62, %v65
    %v174 = vsub.f32 %v63, %v66
    %v175 = vmul.f32 %v172, %v172
    %v176 = vmul.f32 %v173, %v173
    %v177 = vadd.f32 %v175, %v176
    %v178 = vmul.f32 %v174, %v174
    %v179 = vadd.f32 %v177, %v178
    %v180 = vrsqrt.pop %v179
    %v181 = vmul.f32 %v180, %v179
    %v182 = vmul.f32 %v181, %v180
    %v183 = vmul.f32 0.5, %v182
    %v184 = vsub.f32 1.5, %v183
    %v185 = vmul.f32 %v180, %v184
    %v186 = vmul.f32 %v179, %v185
    %vm187 = vcmp.eq.f32.partialorder %v179, inf
    %v188 = vsel %vm187, %v179, %v186
    %vm189 = vcmp.eq.f32.partialorder %v179, 0.0
    %v190 = vand.u32 %v179, 2147483648
    %v191 = vsel %vm189, %v190, %v188
    %v192 = vsub.f32 %v171, %v191
    %v193 = vand.u32 2147483647, %v192
    %v194 = vadd.f32 %v151, %v193
    %v195 = vld [vmem:[#allocation2] sm:$0xff]
    %v196 = vadd.f32 %v195, %v194
    %197 = vst [vmem:[#allocation2] sm:$0xff] %v196
    // Predicated region
    $region22: #{tpu_custom_call.1} parent=1 // pred_check
      %p198 = pneg %p44
    $region23: #{tpu_custom_call.1} parent=1 // pred_check_branch
      %200 = sbr.rel (%p198) target = $region25
    $region24: #{tpu_custom_call.1} parent=1 // pred_region
      %v201 = vld [vmem:[#allocation2] sm:$0xff]
      %202 = vadd.xlane.f32.xlu0 %v201
      %v203 = vpop.xlane.xlu0 %202
      %v204 = vrot.slane %v203, 4
      %v205 = vadd.f32 %v203, %v204
      %v206 = vrot.slane %v205, 2
      %v207 = vadd.f32 %v205, %v206
      %v208 = vrot.slane %v207, 1
      %v209 = vadd.f32 %v207, %v208
      %s210 = vtos %v209
      %s211 = scalar_lea.smem [#allocation8], 0
      %212 = sst [smem:[%s211]] %s210
    $region25: #{tpu_custom_call.1} parent=1 // pred_fallthru
      _
    // Predicated region
    $region26: #{tpu_custom_call.1} parent=1 // pred_check
      _
    $region27: #{tpu_custom_call.1} parent=1 // pred_check_branch
      %214 = sbr.rel (0) target = $region29
    $region28: #{tpu_custom_call.1} parent=1 // pred_region
      %216 = vsyncadd [#allocation5], 0
      %s218 = sshll.u32 %s2, 4
      %s219 = int_to_ptr.hbm [resolvable:$true] %s218
      %221 = dma.smem_to_hbm [#allocation8], 16, %s219, [#allocation5]
    $region29: #{tpu_custom_call.1} parent=1 // pred_fallthru
      _
    // Predicated region
    $region30: #{tpu_custom_call.1} parent=1 // pred_check
      _
    $region31: #{tpu_custom_call.1} parent=1 // pred_check_branch
      %223 = sbr.rel (0) target = $region33
    $region32: #{tpu_custom_call.1} parent=1 // pred_region
      %225 = dma.done [#allocation5], 16
    $region33: #{tpu_custom_call.1} parent=1 // pred_fallthru
      _
    %226 = sfence
    %227 = vsyncpa [#allocation4], 1
    %228 = vsyncpa [#allocation7], 1
    %229 = vsyncpa [#allocation5], 1

</llo_original>
